<compile_context>
chip_gen: v7x
topology: tpu7x:2x2x1
jax: 0.10.0
libtpu: 0.0.40
codegen_flags: <defaults>
</compile_context>

<pallas_src>
import functools

import jax
import jax.numpy as jnp
from jax import lax
from jax.experimental import pallas as pl
from jax.experimental.pallas import tpu as pltpu


def _conv3x3_kernel(x_ref, w_ref, b_ref, mask_ref, o_ref, *, W):
    """3x3 'same' conv over the lane-dense flattened spatial dim.

    x_ref    : (Bn, Cin, H*W)   input images (lane dim = H*W)
    w_ref    : (3, 3, Cout, Cin) weights indexed [ky, kx]
    b_ref    : (Cout, 1)         bias (broadcasts over lanes)
    mask_ref : (4, H*W) f32      grid-invariant boundary masks:
               [0] w >= 1    (valid lanes for the dx=-1 input roll)
               [1] w <= W-2  (valid lanes for the dx=+1 input roll)
               [2] h >= 1    (valid lanes for the dy=-1 output roll)
               [3] h <= H-2  (valid lanes for the dy=+1 output roll)
    o_ref    : (Bn, Cout, H*W)   lane-dense output
    """
    Bn, Cin, HW = x_ref.shape

    # Hoisted once per grid step (independent of the image index).
    col_m = mask_ref[0:1, :]
    col_p = mask_ref[1:2, :]
    row_m = mask_ref[2:3, :]
    row_p = mask_ref[3:4, :]
    bias = b_ref[...]  # (Cout, 1)

    def one_image(b, carry):
        x0 = x_ref[b]                                      # (Cin, HW)
        # Only two full-width (Cin,HW) XLU rolls: the dx=+-1 column shifts,
        # with the column-boundary mask folded on once.
        xm = pltpu.roll(x0, shift=1, axis=1) * col_m       # x[., w-1]
        xp = pltpu.roll(x0, shift=HW - 1, axis=1) * col_p  # x[., w+1]

        def dy_partial(ky):
            # Fuse the three same-dy taps: 3 accumulating K=Cin dots into one
            # (Cout, HW) partial (no stacked (3*Cin,HW) scratch store).
            return (
                jnp.dot(w_ref[ky, 0], xm, preferred_element_type=jnp.float32)
                + jnp.dot(w_ref[ky, 1], x0, preferred_element_type=jnp.float32)
                + jnp.dot(w_ref[ky, 2], xp, preferred_element_type=jnp.float32)
            )

        # dy=+-1 row shifts applied to the small (Cout,HW) partials (Cout=3
        # << Cin), with the row-boundary mask on the rolled outputs. Roll
        # wrap-around lands exactly on the masked rows, so it is zeroed.
        acc = dy_partial(1)                                                 # dy = 0
        acc = acc + pltpu.roll(dy_partial(0), shift=W, axis=1) * row_m      # dy = -1
        acc = acc + pltpu.roll(dy_partial(2), shift=HW - W, axis=1) * row_p  # dy = +1

        o_ref[b] = (acc + bias).astype(o_ref.dtype)
        return carry

    # fori_loop (not a static Python unroll) bounds live ranges across images
    # and gives the scheduler a visible loop.
    lax.fori_loop(0, Bn, one_image, 0, unroll=(Bn <= 4))


def _choose_batch_block(n, bytes_per_image):
    """Images per grid step: target ~4 MiB of input per step, keep enough grid
    steps for DMA pipelining / 2-TC sharding (>=4 steps when the batch allows,
    else >=2), and require the block to divide the batch.

    TODO(synk): relax the divisibility requirement with a pl.cdiv grid and a
                masked tail block for awkward batch sizes.
    """
    target_bytes = 4 << 20
    cap = max(1, target_bytes // max(1, bytes_per_image))
    if n >= 4:
        cap = min(cap, n // 4)
    elif n >= 2:
        cap = min(cap, n // 2)
    cap = max(1, min(cap, n))
    bn = 1
    for d in range(1, cap + 1):
        if n % d == 0:
            bn = d
    return bn


def reconstruction_forward(x_nchw, weight, bias):
    """Conv2d(Cin, Cout=3, kernel_size=3, stride=1, padding=1) forward.

    x_nchw : (N, Cin, H, W) float32
    weight : (Cout=3, Cin, 3, 3) (PyTorch OIHW conv weight layout)
    bias   : (Cout=3,)
    returns: (N, Cout, H, W)
    """
    N, Cin, H, W = x_nchw.shape
    Cout = weight.shape[0]
    HW = H * W

    # Free (contiguous) reshape: NCHW -> (N, Cin, H*W). No transpose, no pad.
    x_flat = x_nchw.reshape(N, Cin, HW)
    # (Cout, Cin, ky, kx) -> (ky, kx, Cout, Cin): matches the in-kernel
    # (Cout, Cin) @ (Cin, HW) dots with no in-kernel layout fixups.
    w_taps = jnp.transpose(weight, (2, 3, 0, 1))
    b_col = bias.reshape(Cout, 1).astype(jnp.float32)

    # Boundary masks precomputed once in the wrapper (tiny, grid-invariant),
    # so no per-image iota / integer div-mod work runs on the VPU in-kernel.
    pos = jnp.arange(HW, dtype=jnp.int32)
    w_pos = pos % W
    h_pos = pos // W
    masks = jnp.stack(
        [
            w_pos >= 1,       # dx = -1 column validity
            w_pos <= W - 2,   # dx = +1 column validity
            h_pos >= 1,       # dy = -1 row validity
            h_pos <= H - 2,   # dy = +1 row validity
        ],
        axis=0,
    ).astype(jnp.float32)  # (4, HW)

    itemsize = jnp.dtype(x_nchw.dtype).itemsize
    Bn = _choose_batch_block(N, Cin * HW * itemsize)

    # TODO(synk): for feature maps where a whole image (Cin*HW*4B, double
    #             buffered) no longer fits the VMEM budget, add a second grid
    #             axis over row blocks with a one-row halo; not needed at
    #             reconstruction's sizes here.
    kernel = functools.partial(_conv3x3_kernel, W=W)
    out_flat = pl.pallas_call(
        kernel,
        out_shape=jax.ShapeDtypeStruct((N, Cout, HW), x_nchw.dtype),
        grid_spec=pltpu.PrefetchScalarGridSpec(
            num_scalar_prefetch=0,
            grid=(N // Bn,),
            in_specs=[
                pl.BlockSpec((Bn, Cin, HW), lambda n: (n, 0, 0)),
                pl.BlockSpec((3, 3, Cout, Cin), lambda n: (0, 0, 0, 0)),
                pl.BlockSpec((Cout, 1), lambda n: (0, 0)),
                pl.BlockSpec((4, HW), lambda n: (0, 0)),
            ],
            out_specs=pl.BlockSpec((Bn, Cout, HW), lambda n: (n, 0, 0)),
        ),
        compiler_params=pltpu.CompilerParams(
            dimension_semantics=("parallel",),
            vmem_limit_bytes=48 * 1024 * 1024,  # below v7x's 64 MiB physical VMEM
        ),
    )(x_flat, w_taps, b_col, masks)

    # Free reshape back to NCHW.
    return out_flat.reshape(N, Cout, H, W)


def _reference_forward(x_nchw, weight, bias):
    # Pure-JAX reference: lax conv in NCHW/OIHW, padding=1.
    y = lax.conv_general_dilated(
        x_nchw,
        weight,
        window_strides=(1, 1),
        padding=((1, 1), (1, 1)),
        dimension_numbers=("NCHW", "OIHW", "NCHW"),
    )
    return y + bias.reshape(1, -1, 1, 1)


if __name__ == "__main__":
    key = jax.random.PRNGKey(0)
    k_x, k_w, k_b = jax.random.split(key, 3)

    N, Cin, H, W = 2, 4, 16, 16
    Cout = 3

    x = jax.random.normal(k_x, (N, Cin, H, W), dtype=jnp.float32)
    # Deterministic synthetic params (xavier-ish scale); no checkpoint loading.
    weight = 0.1 * jax.random.normal(k_w, (Cout, Cin, 3, 3), dtype=jnp.float32)
    bias = 0.01 * jax.random.normal(k_b, (Cout,), dtype=jnp.float32)

    out = reconstruction_forward(x, weight, bias)
    out = jax.block_until_ready(out)

    ref = _reference_forward(x, weight, bias)
    assert out.shape == (N, Cout, H, W)
    assert jnp.allclose(out, ref, atol=1e-4, rtol=1e-4), float(
        jnp.max(jnp.abs(out - ref))
    )

    print("KERNEL_OK")
</pallas_src>

<mosaic_0001>
module attributes {stable_mosaic.version = 11 : i64} {
  func.func @_conv3x3_kernel(%arg0: i32, %arg1: memref<1x4x256xf32, #tpu.memory_space<vmem>>, %arg2: memref<3x3x3x4xf32, #tpu.memory_space<vmem>>, %arg3: memref<3x1xf32, #tpu.memory_space<vmem>>, %arg4: memref<4x256xf32, #tpu.memory_space<vmem>>, %arg5: memref<1x3x256xf32, #tpu.memory_space<vmem>>) attributes {dimension_semantics = [#tpu.dimension_semantics<parallel>], iteration_bounds = array<i64: 2>, scalar_prefetch = 0 : i64, scratch_operands = 0 : i64, tpu.core_type = #tpu.core_type<tc>, window_params = [{transform_indices = @transform_0, window_bounds = array<i64: 1, 4, 256>}, {pipeline_mode = #tpu.pipeline_mode<synchronous>, transform_indices = @transform_1, window_bounds = array<i64: 3, 3, 3, 4>}, {pipeline_mode = #tpu.pipeline_mode<synchronous>, transform_indices = @transform_2, window_bounds = array<i64: 3, 1>}, {pipeline_mode = #tpu.pipeline_mode<synchronous>, transform_indices = @transform_3, window_bounds = array<i64: 4, 256>}, {transform_indices = @transform_4, window_bounds = array<i64: 1, 3, 256>}]} {
    %c0 = arith.constant 0 : index
    %c0_0 = arith.constant 0 : index
    %0 = vector.load %arg4[%c0, %c0_0] : memref<4x256xf32, #tpu.memory_space<vmem>>, vector<1x256xf32>
    %c1 = arith.constant 1 : index
    %c0_1 = arith.constant 0 : index
    %1 = vector.load %arg4[%c1, %c0_1] : memref<4x256xf32, #tpu.memory_space<vmem>>, vector<1x256xf32>
    %c2 = arith.constant 2 : index
    %c0_2 = arith.constant 0 : index
    %2 = vector.load %arg4[%c2, %c0_2] : memref<4x256xf32, #tpu.memory_space<vmem>>, vector<1x256xf32>
    %c3 = arith.constant 3 : index
    %c0_3 = arith.constant 0 : index
    %3 = vector.load %arg4[%c3, %c0_3] : memref<4x256xf32, #tpu.memory_space<vmem>>, vector<1x256xf32>
    %c0_4 = arith.constant 0 : index
    %c0_5 = arith.constant 0 : index
    %4 = vector.load %arg3[%c0_4, %c0_5] : memref<3x1xf32, #tpu.memory_space<vmem>>, vector<3x1xf32>
    %c0_i32 = arith.constant 0 : i32
    %5 = arith.index_cast %c0_i32 : i32 to index
    %c0_6 = arith.constant 0 : index
    %c0_7 = arith.constant 0 : index
    %6 = vector.load %arg1[%5, %c0_6, %c0_7] : memref<1x4x256xf32, #tpu.memory_space<vmem>>, vector<1x4x256xf32>
    %7 = vector.shape_cast %6 : vector<1x4x256xf32> to vector<4x256xf32>
    %c1_i32 = arith.constant 1 : i32
    %8 = tpu.dynamic_rotate %7 by %c1_i32 dim 1 : vector<4x256xf32>, i32 -> vector<4x256xf32>
    %9 = vector.broadcast %0 : vector<1x256xf32> to vector<4x256xf32>
    %10 = arith.mulf %8, %9 : vector<4x256xf32>
    %c255_i32 = arith.constant 255 : i32
    %11 = tpu.dynamic_rotate %7 by %c255_i32 dim 1 : vector<4x256xf32>, i32 -> vector<4x256xf32>
    %12 = vector.broadcast %1 : vector<1x256xf32> to vector<4x256xf32>
    %13 = arith.mulf %11, %12 : vector<4x256xf32>
    %c1_8 = arith.constant 1 : index
    %c0_9 = arith.constant 0 : index
    %c0_10 = arith.constant 0 : index
    %c0_11 = arith.constant 0 : index
    %14 = vector.load %arg2[%c1_8, %c0_9, %c0_10, %c0_11] : memref<3x3x3x4xf32, #tpu.memory_space<vmem>>, vector<1x1x3x4xf32>
    %15 = vector.shape_cast %14 : vector<1x1x3x4xf32> to vector<3x4xf32>
    %cst = arith.constant dense<0.000000e+00> : vector<3x256xf32>
    %16 = tpu.matmul %15, %10, %cst {dimension_numbers = #tpu.dot_dimension_numbers<[1], [0], [0], [1], [0, 0, 1, 1], [], []>} : vector<3x4xf32>, vector<4x256xf32>, vector<3x256xf32> -> vector<3x256xf32>
    %c1_12 = arith.constant 1 : index
    %c1_13 = arith.constant 1 : index
    %c0_14 = arith.constant 0 : index
    %c0_15 = arith.constant 0 : index
    %17 = vector.load %arg2[%c1_12, %c1_13, %c0_14, %c0_15] : memref<3x3x3x4xf32, #tpu.memory_space<vmem>>, vector<1x1x3x4xf32>
    %18 = vector.shape_cast %17 : vector<1x1x3x4xf32> to vector<3x4xf32>
    %cst_16 = arith.constant dense<0.000000e+00> : vector<3x256xf32>
    %19 = tpu.matmul %18, %7, %cst_16 {dimension_numbers = #tpu.dot_dimension_numbers<[1], [0], [0], [1], [0, 0, 1, 1], [], []>} : vector<3x4xf32>, vector<4x256xf32>, vector<3x256xf32> -> vector<3x256xf32>
    %20 = arith.addf %16, %19 : vector<3x256xf32>
    %c1_17 = arith.constant 1 : index
    %c2_18 = arith.constant 2 : index
    %c0_19 = arith.constant 0 : index
    %c0_20 = arith.constant 0 : index
    %21 = vector.load %arg2[%c1_17, %c2_18, %c0_19, %c0_20] : memref<3x3x3x4xf32, #tpu.memory_space<vmem>>, vector<1x1x3x4xf32>
    %22 = vector.shape_cast %21 : vector<1x1x3x4xf32> to vector<3x4xf32>
    %cst_21 = arith.constant dense<0.000000e+00> : vector<3x256xf32>
    %23 = tpu.matmul %22, %13, %cst_21 {dimension_numbers = #tpu.dot_dimension_numbers<[1], [0], [0], [1], [0, 0, 1, 1], [], []>} : vector<3x4xf32>, vector<4x256xf32>, vector<3x256xf32> -> vector<3x256xf32>
    %24 = arith.addf %20, %23 : vector<3x256xf32>
    %c0_22 = arith.constant 0 : index
    %c0_23 = arith.constant 0 : index
    %c0_24 = arith.constant 0 : index
    %c0_25 = arith.constant 0 : index
    %25 = vector.load %arg2[%c0_22, %c0_23, %c0_24, %c0_25] : memref<3x3x3x4xf32, #tpu.memory_space<vmem>>, vector<1x1x3x4xf32>
    %26 = vector.shape_cast %25 : vector<1x1x3x4xf32> to vector<3x4xf32>
    %cst_26 = arith.constant dense<0.000000e+00> : vector<3x256xf32>
    %27 = tpu.matmul %26, %10, %cst_26 {dimension_numbers = #tpu.dot_dimension_numbers<[1], [0], [0], [1], [0, 0, 1, 1], [], []>} : vector<3x4xf32>, vector<4x256xf32>, vector<3x256xf32> -> vector<3x256xf32>
    %c0_27 = arith.constant 0 : index
    %c1_28 = arith.constant 1 : index
    %c0_29 = arith.constant 0 : index
    %c0_30 = arith.constant 0 : index
    %28 = vector.load %arg2[%c0_27, %c1_28, %c0_29, %c0_30] : memref<3x3x3x4xf32, #tpu.memory_space<vmem>>, vector<1x1x3x4xf32>
    %29 = vector.shape_cast %28 : vector<1x1x3x4xf32> to vector<3x4xf32>
    %cst_31 = arith.constant dense<0.000000e+00> : vector<3x256xf32>
    %30 = tpu.matmul %29, %7, %cst_31 {dimension_numbers = #tpu.dot_dimension_numbers<[1], [0], [0], [1], [0, 0, 1, 1], [], []>} : vector<3x4xf32>, vector<4x256xf32>, vector<3x256xf32> -> vector<3x256xf32>
    %31 = arith.addf %27, %30 : vector<3x256xf32>
    %c0_32 = arith.constant 0 : index
    %c2_33 = arith.constant 2 : index
    %c0_34 = arith.constant 0 : index
    %c0_35 = arith.constant 0 : index
    %32 = vector.load %arg2[%c0_32, %c2_33, %c0_34, %c0_35] : memref<3x3x3x4xf32, #tpu.memory_space<vmem>>, vector<1x1x3x4xf32>
    %33 = vector.shape_cast %32 : vector<1x1x3x4xf32> to vector<3x4xf32>
    %cst_36 = arith.constant dense<0.000000e+00> : vector<3x256xf32>
    %34 = tpu.matmul %33, %13, %cst_36 {dimension_numbers = #tpu.dot_dimension_numbers<[1], [0], [0], [1], [0, 0, 1, 1], [], []>} : vector<3x4xf32>, vector<4x256xf32>, vector<3x256xf32> -> vector<3x256xf32>
    %35 = arith.addf %31, %34 : vector<3x256xf32>
    %c16_i32 = arith.constant 16 : i32
    %36 = tpu.dynamic_rotate %35 by %c16_i32 dim 1 : vector<3x256xf32>, i32 -> vector<3x256xf32>
    %37 = vector.broadcast %2 : vector<1x256xf32> to vector<3x256xf32>
    %38 = arith.mulf %36, %37 : vector<3x256xf32>
    %39 = arith.addf %24, %38 : vector<3x256xf32>
    %c2_37 = arith.constant 2 : index
    %c0_38 = arith.constant 0 : index
    %c0_39 = arith.constant 0 : index
    %c0_40 = arith.constant 0 : index
    %40 = vector.load %arg2[%c2_37, %c0_38, %c0_39, %c0_40] : memref<3x3x3x4xf32, #tpu.memory_space<vmem>>, vector<1x1x3x4xf32>
    %41 = vector.shape_cast %40 : vector<1x1x3x4xf32> to vector<3x4xf32>
    %cst_41 = arith.constant dense<0.000000e+00> : vector<3x256xf32>
    %42 = tpu.matmul %41, %10, %cst_41 {dimension_numbers = #tpu.dot_dimension_numbers<[1], [0], [0], [1], [0, 0, 1, 1], [], []>} : vector<3x4xf32>, vector<4x256xf32>, vector<3x256xf32> -> vector<3x256xf32>
    %c2_42 = arith.constant 2 : index
    %c1_43 = arith.constant 1 : index
    %c0_44 = arith.constant 0 : index
    %c0_45 = arith.constant 0 : index
    %43 = vector.load %arg2[%c2_42, %c1_43, %c0_44, %c0_45] : memref<3x3x3x4xf32, #tpu.memory_space<vmem>>, vector<1x1x3x4xf32>
    %44 = vector.shape_cast %43 : vector<1x1x3x4xf32> to vector<3x4xf32>
    %cst_46 = arith.constant dense<0.000000e+00> : vector<3x256xf32>
    %45 = tpu.matmul %44, %7, %cst_46 {dimension_numbers = #tpu.dot_dimension_numbers<[1], [0], [0], [1], [0, 0, 1, 1], [], []>} : vector<3x4xf32>, vector<4x256xf32>, vector<3x256xf32> -> vector<3x256xf32>
    %46 = arith.addf %42, %45 : vector<3x256xf32>
    %c2_47 = arith.constant 2 : index
    %c2_48 = arith.constant 2 : index
    %c0_49 = arith.constant 0 : index
    %c0_50 = arith.constant 0 : index
    %47 = vector.load %arg2[%c2_47, %c2_48, %c0_49, %c0_50] : memref<3x3x3x4xf32, #tpu.memory_space<vmem>>, vector<1x1x3x4xf32>
    %48 = vector.shape_cast %47 : vector<1x1x3x4xf32> to vector<3x4xf32>
    %cst_51 = arith.constant dense<0.000000e+00> : vector<3x256xf32>
    %49 = tpu.matmul %48, %13, %cst_51 {dimension_numbers = #tpu.dot_dimension_numbers<[1], [0], [0], [1], [0, 0, 1, 1], [], []>} : vector<3x4xf32>, vector<4x256xf32>, vector<3x256xf32> -> vector<3x256xf32>
    %50 = arith.addf %46, %49 : vector<3x256xf32>
    %c240_i32 = arith.constant 240 : i32
    %51 = tpu.dynamic_rotate %50 by %c240_i32 dim 1 : vector<3x256xf32>, i32 -> vector<3x256xf32>
    %52 = vector.broadcast %3 : vector<1x256xf32> to vector<3x256xf32>
    %53 = arith.mulf %51, %52 : vector<3x256xf32>
    %54 = arith.addf %39, %53 : vector<3x256xf32>
    %55 = vector.broadcast %4 : vector<3x1xf32> to vector<3x256xf32>
    %56 = arith.addf %54, %55 : vector<3x256xf32>
    %57 = arith.index_cast %c0_i32 : i32 to index
    %c0_52 = arith.constant 0 : index
    %c0_53 = arith.constant 0 : index
    %58 = vector.load %arg5[%57, %c0_52, %c0_53] : memref<1x3x256xf32, #tpu.memory_space<vmem>>, vector<1x3x256xf32>
    %59 = vector.shape_cast %58 : vector<1x3x256xf32> to vector<3x256xf32>
    %60 = vector.shape_cast %56 : vector<3x256xf32> to vector<1x3x256xf32>
    tpu.vector_store %arg5[%57, %c0_52, %c0_53], %60 {strides = array<i32>} : memref<1x3x256xf32, #tpu.memory_space<vmem>>, vector<1x3x256xf32>,
    %c1_i32_54 = arith.constant 1 : i32
    return
  }
  func.func @transform_0(%arg0: i32) -> (i32, i32, i32) {
    %c0_i32 = arith.constant 0 : i32
    %c0_i32_0 = arith.constant 0 : i32
    %c0_i32_1 = arith.constant 0 : i32
    return %arg0, %c0_i32, %c0_i32_0 : i32, i32, i32
  }
  func.func @transform_1(%arg0: i32) -> (i32, i32, i32, i32) {
    %c0_i32 = arith.constant 0 : i32
    %c0_i32_0 = arith.constant 0 : i32
    %c0_i32_1 = arith.constant 0 : i32
    %c0_i32_2 = arith.constant 0 : i32
    %c0_i32_3 = arith.constant 0 : i32
    return %c0_i32, %c0_i32_0, %c0_i32_1, %c0_i32_2 : i32, i32, i32, i32
  }
  func.func @transform_2(%arg0: i32) -> (i32, i32) {
    %c0_i32 = arith.constant 0 : i32
    %c0_i32_0 = arith.constant 0 : i32
    %c0_i32_1 = arith.constant 0 : i32
    return %c0_i32, %c0_i32_0 : i32, i32
  }
  func.func @transform_3(%arg0: i32) -> (i32, i32) {
    %c0_i32 = arith.constant 0 : i32
    %c0_i32_0 = arith.constant 0 : i32
    %c0_i32_1 = arith.constant 0 : i32
    return %c0_i32, %c0_i32_0 : i32, i32
  }
  func.func @transform_4(%arg0: i32) -> (i32, i32, i32) {
    %c0_i32 = arith.constant 0 : i32
    %c0_i32_0 = arith.constant 0 : i32
    %c0_i32_1 = arith.constant 0 : i32
    return %arg0, %c0_i32, %c0_i32_0 : i32, i32, i32
  }
}

</mosaic_0001>

<llo_original>
// kernel: tpu_custom_call.1
$region0: #{tpu_custom_call.1}
  #allocation0 [shape = 'u32[]', space=smem, size = 0x4, offset = 0x4, fixed_abs, tag = 'smem constant byte address 0x4 - core index']
  #allocation1 [shape = 'u32[144,128]{1,0:T(1,128)}', space=vmem, size = 0x12000, scoped, tag = 'internal scratch']
  %s0 = inlined_call_operand.hbm [shape: f32[2,4,256], index: 0, kind: input, shape index: {}]
  %s1 = inlined_call_operand.hbm [shape: f32[3,3,3,4], index: 1, kind: input, shape index: {}]
  %s2 = inlined_call_operand.vmem [shape: f32[3,1], index: 2, kind: input, shape index: {}]
  %s3 = inlined_call_operand.vmem [shape: f32[4,256], index: 3, kind: input, shape index: {}]
  %s4 = inlined_call_operand.vmem [shape: f32[2,3,256], index: 4, kind: output, shape index: {}]
  %s5 = sld [smem:[#allocation0]]
  $region57: #{tpu_custom_call.1} parent=0
    _
  %s7 = ssub.s32 1, %s5
  %s8 = scalar_select 0, %s7, %s5
  $region1: #{tpu_custom_call.1} parent=0
    #allocation2 [shape = 'u8[8192]{0}', space=vmem, size = 0x2000, scoped, tag = 'input window, operand 0']
    #allocation3 [shape = 's32[2]{0}', space=sflag, size = 0x8, scoped, tag = 'scoped memory for tpu_custom_call.1']
    #allocation4 [shape = 'u8[18432]{0}', space=vmem, size = 0x4800, scoped, tag = 'input window, operand 1, single buffered']
    #allocation5 [shape = 's32[1]{0}', space=sflag, size = 0x4, scoped, tag = 'scoped memory for tpu_custom_call.1']
    %9 = vsyncpa [#allocation3], 0
    %s10 = scalar_lea.sflag [#allocation3], 1
    %11 = vsyncpa %s10, 0
    %12 = vsyncpa [#allocation5], 0
    loop: start=0, step=1, limit=4
    $region2: #{tpu_custom_call.1} parent=1 // loop_pre_header
      _
    $region3: #{tpu_custom_call.1} parent=1 // loop_header
      %s14 = sphi 0, %s18
      %p15 = scmp.ge.s32.totalorder %s14, 4
      %s24 = sphi 0, %s26
      %s27 = sphi 0, %s24
      %s28 = sphi 0, %s27
      %s44 = sphi 0, %s28
      %s48 = sphi 0, %s48
      %s50 = sphi 0, %s48
      %s51 = sphi 0, %s50
      %s65 = sphi 0, %s51
      %s69 = sphi 0, %s69
      %s71 = sphi 0, %s69
      %s72 = sphi 0, %s71
      %s86 = sphi 0, %s72
      %s90 = sphi 0, %s90
      %s92 = sphi 0, %s90
      %s93 = sphi 0, %s92
      %s107 = sphi 0, %s93
      %s113 = sphi 0, %s115
      %s116 = sphi 0, %s113
      %s117 = sphi 0, %s116
      %s133 = sphi 0, %s117
    $region4: #{tpu_custom_call.1} parent=1 // loop_header_branch
      %17 = sbr.rel (%p15) target = $region8
    $region5: #{tpu_custom_call.1} parent=1 // loop_body
      %s19 = ssub.s32 %s14, 1
      %s20 = ssub.s32 %s14, 2
      %s21 = sadd.s32 %s14, 1
      %s22 = ssub.s32 %s14, %s21
      %p23 = scmp.eq.s32.totalorder %s22, 0
      %s25 = sadd.s32 %s24, 1
      %s26 = scalar_select %p23, %s24, %s25
      %p29 = pneg %p23
      %p30 = scmp.eq.s32.totalorder %s14, 1
      %p31 = por %p29, %p30
      %p32 = scmp.ne.s32.totalorder %s24, %s27
      %p33 = scmp.eq.s32.totalorder %s14, 0
      %p34 = por %p32, %p33
      %p35 = scmp.ne.s32.totalorder %s24, %s27
      %p36 = scmp.eq.s32.totalorder %s19, 1
      %p37 = por %p35, %p36
      %p38 = scmp.ne.s32.totalorder %s27, %s28
      %p39 = scmp.eq.s32.totalorder %s19, 0
      %p40 = por %p38, %p39
      %p41 = scmp.ne.s32.totalorder %s27, %s28
      %p42 = scmp.eq.s32.totalorder %s20, 1
      %p43 = por %p41, %p42
      %p45 = scmp.ne.s32.totalorder %s28, %s44
      %p46 = scmp.eq.s32.totalorder %s20, 0
      %p47 = por %p45, %p46
      %s49 = sadd.s32 %s48, 1
      %p52 = scmp.eq.s32.totalorder %s14, 1
      %p53 = scmp.ne.s32.totalorder %s48, %s50
      %p54 = scmp.eq.s32.totalorder %s14, 0
      %p55 = por %p53, %p54
      %p56 = scmp.ne.s32.totalorder %s48, %s50
      %p57 = scmp.eq.s32.totalorder %s19, 1
      %p58 = por %p56, %p57
      %p59 = scmp.ne.s32.totalorder %s50, %s51
      %p60 = scmp.eq.s32.totalorder %s19, 0
      %p61 = por %p59, %p60
      %p62 = scmp.ne.s32.totalorder %s50, %s51
      %p63 = scmp.eq.s32.totalorder %s20, 1
      %p64 = por %p62, %p63
      %p66 = scmp.ne.s32.totalorder %s51, %s65
      %p67 = scmp.eq.s32.totalorder %s20, 0
      %p68 = por %p66, %p67
      %s70 = sadd.s32 %s69, 1
      %p73 = scmp.eq.s32.totalorder %s14, 1
      %p74 = scmp.ne.s32.totalorder %s69, %s71
      %p75 = scmp.eq.s32.totalorder %s14, 0
      %p76 = por %p74, %p75
      %p77 = scmp.ne.s32.totalorder %s69, %s71
      %p78 = scmp.eq.s32.totalorder %s19, 1
      %p79 = por %p77, %p78
      %p80 = scmp.ne.s32.totalorder %s71, %s72
      %p81 = scmp.eq.s32.totalorder %s19, 0
      %p82 = por %p80, %p81
      %p83 = scmp.ne.s32.totalorder %s71, %s72
      %p84 = scmp.eq.s32.totalorder %s20, 1
      %p85 = por %p83, %p84
      %p87 = scmp.ne.s32.totalorder %s72, %s86
      %p88 = scmp.eq.s32.totalorder %s20, 0
      %p89 = por %p87, %p88
      %s91 = sadd.s32 %s90, 1
      %p94 = scmp.eq.s32.totalorder %s14, 1
      %p95 = scmp.ne.s32.totalorder %s90, %s92
      %p96 = scmp.eq.s32.totalorder %s14, 0
      %p97 = por %p95, %p96
      %p98 = scmp.ne.s32.totalorder %s90, %s92
      %p99 = scmp.eq.s32.totalorder %s19, 1
      %p100 = por %p98, %p99
      %p101 = scmp.ne.s32.totalorder %s92, %s93
      %p102 = scmp.eq.s32.totalorder %s19, 0
      %p103 = por %p101, %p102
      %p104 = scmp.ne.s32.totalorder %s92, %s93
      %p105 = scmp.eq.s32.totalorder %s20, 1
      %p106 = por %p104, %p105
      %p108 = scmp.ne.s32.totalorder %s93, %s107
      %p109 = scmp.eq.s32.totalorder %s20, 0
      %p110 = por %p108, %p109
      %s111 = ssub.s32 %s14, %s21
      %p112 = scmp.eq.s32.totalorder %s111, 0
      %s114 = sadd.s32 %s113, 1
      %s115 = scalar_select %p112, %s113, %s114
      %p118 = pneg %p112
      %p119 = scmp.eq.s32.totalorder %s14, 1
      %p120 = por %p118, %p119
      %p121 = scmp.ne.s32.totalorder %s113, %s116
      %p122 = scmp.eq.s32.totalorder %s14, 0
      %p123 = por %p121, %p122
      %p124 = scmp.ne.s32.totalorder %s113, %s116
      %p125 = scmp.eq.s32.totalorder %s19, 1
      %p126 = por %p124, %p125
      %p127 = scmp.ne.s32.totalorder %s116, %s117
      %p128 = scmp.eq.s32.totalorder %s19, 0
      %p129 = por %p127, %p128
      %p130 = scmp.ne.s32.totalorder %s116, %s117
      %p131 = scmp.eq.s32.totalorder %s20, 1
      %p132 = por %p130, %p131
      %p134 = scmp.ne.s32.totalorder %s117, %s133
      %p135 = scmp.eq.s32.totalorder %s20, 0
      %p136 = por %p134, %p135
      %p137 = scmp.le.s32.totalorder 1, %s14
      %p138 = scmp.lt.s32.totalorder %s14, 3
      %p139 = pnand %p137, %p138
      %p140 = pneg %p139
      // Predicated region
      $region9: #{tpu_custom_call.1} parent=5 // pred_check
        _
      $region10: #{tpu_custom_call.1} parent=5 // pred_check_branch
        %142 = sbr.rel (%p139) target = $region12
      $region11: #{tpu_custom_call.1} parent=5 // pred_region
        %s143 = ssub.s32 %s14, 1
        // Predicated region
        $region13: #{tpu_custom_call.1} parent=11 // pred_check
          %p144 = pneg %p61
        $region14: #{tpu_custom_call.1} parent=11 // pred_check_branch
          %146 = sbr.rel (%p144) target = $region16
        $region15: #{tpu_custom_call.1} parent=11 // pred_region
          %s148 = ssub.s32 576, 576
          %149 = vsyncadd [#allocation5], %s148
          %s150 = sshll.u32 [#allocation4], 4
          %s151 = int_to_ptr.vmem [resolvable:$true] %s150
          %156 = dma.hbm_to_vmem [thread:$0]  %s1, 576, %s151, [#allocation5], 64, 64, 4
        $region16: #{tpu_custom_call.1} parent=11 // pred_fallthru
          _
        // Predicated region
        $region17: #{tpu_custom_call.1} parent=11 // pred_check
          %p157 = pneg %p82
        $region18: #{tpu_custom_call.1} parent=11 // pred_check_branch
          %159 = sbr.rel (%p157) target = $region20
        $region19: #{tpu_custom_call.1} parent=11 // pred_region
          _
        $region20: #{tpu_custom_call.1} parent=11 // pred_fallthru
          _
        // Predicated region
        $region21: #{tpu_custom_call.1} parent=11 // pred_check
          %p160 = pneg %p103
        $region22: #{tpu_custom_call.1} parent=11 // pred_check_branch
          %162 = sbr.rel (%p160) target = $region24
        $region23: #{tpu_custom_call.1} parent=11 // pred_region
          _
        $region24: #{tpu_custom_call.1} parent=11 // pred_fallthru
          _
      $region12: #{tpu_custom_call.1} parent=5 // pred_fallthru
        _
      %p163 = scmp.lt.s32.totalorder %s14, 2
      // Predicated region
      $region25: #{tpu_custom_call.1} parent=5 // pred_check
        %p164 = pneg %p163
      $region26: #{tpu_custom_call.1} parent=5 // pred_check_branch
        %166 = sbr.rel (%p164) target = $region28
      $region27: #{tpu_custom_call.1} parent=5 // pred_region
        // Predicated region
        $region29: #{tpu_custom_call.1} parent=27 // pred_check
          %p167 = pneg %p34
        $region30: #{tpu_custom_call.1} parent=27 // pred_check_branch
          %169 = sbr.rel (%p167) target = $region32
        $region31: #{tpu_custom_call.1} parent=27 // pred_region
          %s170 = sand.u32 %s24, 1
          %s171 = scalar_lea.sflag [#allocation3], %s170
          %s172 = sand.u32 %s24, 1
          %s173 = smul.addr %s172, 8
          %s174 = scalar_lea.vmem [#allocation2], %s173
          %s176 = ssub.s32 128, 128
          %177 = vsyncadd %s171, %s176
          %s178 = smul.addr %s14, 2
          %s179 = smul.addr %s178, 64
          %s180 = scalar_lea.hbm %s0, %s179
          %s182 = sshll.u32 %s174, 4
          %s183 = int_to_ptr.vmem [resolvable:$true] %s182
          %185 = dma.hbm_to_vmem [thread:$0]  %s180, 128, %s183, %s171
        $region32: #{tpu_custom_call.1} parent=27 // pred_fallthru
          _
      $region28: #{tpu_custom_call.1} parent=5 // pred_fallthru
        _
      %p186 = scmp.le.s32.totalorder 1, %s14
      %p187 = scmp.lt.s32.totalorder %s14, 3
      %p188 = pnand %p186, %p187
      %p189 = pneg %p188
      // Predicated region
      $region33: #{tpu_custom_call.1} parent=5 // pred_check
        _
      $region34: #{tpu_custom_call.1} parent=5 // pred_check_branch
        %191 = sbr.rel (%p188) target = $region36
      $region35: #{tpu_custom_call.1} parent=5 // pred_region
        %s192 = ssub.s32 %s14, 1
        %s193 = sand.u32 %s27, 1
        %s194 = scalar_lea.sflag [#allocation3], %s193
        %s195 = sand.u32 %s27, 1
        %s196 = smul.addr %s195, 8
        %s197 = scalar_lea.vmem [#allocation2], %s196
        // Predicated region
        $region37: #{tpu_custom_call.1} parent=35 // pred_check
          %p198 = pneg %p40
        $region38: #{tpu_custom_call.1} parent=35 // pred_check_branch
          %200 = sbr.rel (%p198) target = $region40
        $region39: #{tpu_custom_call.1} parent=35 // pred_region
          %201 = dma.done %s194, 128
        $region40: #{tpu_custom_call.1} parent=35 // pred_fallthru
          _
        // Predicated region
        $region41: #{tpu_custom_call.1} parent=35 // pred_check
          %p202 = pneg %p61
        $region42: #{tpu_custom_call.1} parent=35 // pred_check_branch
          %204 = sbr.rel (%p202) target = $region44
        $region43: #{tpu_custom_call.1} parent=35 // pred_region
          %205 = dma.done [#allocation5], 576
        $region44: #{tpu_custom_call.1} parent=35 // pred_fallthru
          _
        %s206 = sand.u32 %s27, 1
        %s207 = scalar_lea.sflag [#allocation3], %s206
        %s208 = sand.u32 %s27, 1
        %s209 = smul.addr %s208, 8
        %s210 = scalar_lea.vmem [#allocation2], %s209
        %p211 = pneg %p40
        %p212 = pneg %p37
        %p213 = pneg %p61
        %p214 = pneg %p58
        %p215 = pneg %p82
        %p216 = pneg %p79
        %p217 = pneg %p103
        %p218 = pneg %p100
        %p219 = pneg %p129
        %p220 = pneg %p126
        %p221 = scmp.lt.s32.totalorder %s19, 1
        %s222 = scalar_select %p221, %s19, 1
        %s223 = smul.addr %s222, 2
        %s224 = smul.addr %s223, 4
        %s225 = scalar_lea.vmem %s4, %s224
        %p226 = scmp.lt.s32.totalorder %s19, 1
        %s227 = scalar_select %p226, %s19, 1
        %s228 = smul.addr %s227, 2
        %s229 = smul.addr %s228, 4
        %s230 = scalar_lea.vmem %s4, %s229
        %v231 = vld [vmem:[%s3] ss:$4 sm:$0x3]
        %s232 = scalar_lea.vmem %s3, 1
        %v233 = vld [vmem:[%s232] ss:$4 sm:$0x3]
        %s234 = scalar_lea.vmem %s3, 2
        %v235 = vld [vmem:[%s234] ss:$4 sm:$0x3]
        %s236 = scalar_lea.vmem %s3, 3
        %v237 = vld [vmem:[%s236] ss:$4 sm:$0x3]
        %v238 = vld [vmem:[%s2] sm:$0x7]
        %v239 = vld [vmem:[%s197] sm:$0xff]
        %v241 = vcombine.high %v239, %v239
        %243 = vrot.lane.b32.xlu0 %v239, 1
        %v244 = vpop.permute.xlu0 %243
        %245 = vrot.lane.b32.xlu0 %v241, 1
        %v246 = vpop.permute.xlu0 %245
        %v247 = vlaneseq
        %v248 = vand.u32 %v247, 127
        %vm249 = vcmp.lt.s32.totalorder %v248, 1
        %v250 = vsel %vm249, %v244, %v246
        %v251 = vsel %vm249, %v246, %v244
        %v253 = vlaneseq
        %v254 = vshrl.u32 %v253, 7
        %v255 = vsub.s32 0, %v254
        %v256 = vrot.slane %v231, %v255
        %v257 = vlaneseq
        %v258 = vshrl.u32 %v257, 7
        %v259 = vsub.s32 1, %v258
        %v260 = vrot.slane %v231, %v259
        %v263 = vmul.f32 %v251, %v256
        %v264 = vmul.f32 %v250, %v260
        %265 = vrot.lane.b32.xlu0 %v239, 127
        %v266 = vpop.permute.xlu0 %265
        %267 = vrot.lane.b32.xlu0 %v241, 127
        %v268 = vpop.permute.xlu0 %267
        %vm269 = vcmp.lt.s32.totalorder %v248, 127
        %v270 = vsel %vm269, %v266, %v268
        %v271 = vsel %vm269, %v268, %v266
        %v273 = vlaneseq
        %v274 = vshrl.u32 %v273, 7
        %v275 = vsub.s32 0, %v274
        %v276 = vrot.slane %v233, %v275
        %v277 = vlaneseq
        %v278 = vshrl.u32 %v277, 7
        %v279 = vsub.s32 1, %v278
        %v280 = vrot.slane %v233, %v279
        %v283 = vmul.f32 %v270, %v276
        %v284 = vmul.f32 %v271, %v280
        %s285 = scalar_lea.vmem [#allocation4], 12
        %v286 = vld [vmem:[%s285] sm:$0x7]
        %s287 = scalar_lea.vmem [#allocation4], 16
        %v288 = vld [vmem:[%s287] sm:$0x7]
        %vm289 = vcmask 31744
        %v291 = vsel %vm289, %v288, 0
        %vm293 = vcmask 1043456
        %v294 = vsel %vm293, %v239, 0
        %v296 = vsel %vm293, %v241, 0
        %298 = vmatprep.subr.mxu0 %v296
        %299 = vmatpush1.msra.mxu0 %v294
        %300 = vmatprep.subr.mxu0 0.0
        %301 = vmatpush1.msra.mxu0 0.0
        %302 = vmatprep.subr.mxu0 0.0
        %303 = vmatpush1.msra.mxu0 0.0
        %304 = vmatprep.subr.mxu0 0.0
        %305 = vmatpush1.msra.mxu0 0.0
        %306 = vmatprep.subr.mxu0 0.0
        %307 = vmatpush1.msra.mxu0 0.0
        %308 = vmatprep.subr.mxu0 0.0
        %309 = vmatpush1.msra.mxu0 0.0
        %310 = vmatprep.subr.mxu0 0.0
        %311 = vmatpush1.msra.mxu0 0.0
        %312 = vmatprep.subr.mxu0 0.0
        %313 = vmatpush1.msra.mxu0 0.0
        %314 = vmatprep.subr.mxu0 0.0
        %315 = vmatpush1.msra.mxu0 0.0
        %316 = vmatprep.subr.mxu0 0.0
        %317 = vmatpush1.msra.mxu0 0.0
        %318 = vmatprep.subr.mxu0 0.0
        %319 = vmatpush1.msra.mxu0 0.0
        %320 = vmatprep.subr.mxu0 0.0
        %321 = vmatpush1.msra.mxu0 0.0
        %322 = vmatprep.subr.mxu0 0.0
        %323 = vmatpush1.msra.mxu0 0.0
        %324 = vmatprep.subr.mxu0 0.0
        %325 = vmatpush1.msra.mxu0 0.0
        %326 = vmatprep.subr.mxu0 0.0
        %327 = vmatpush1.msra.mxu0 0.0
        %328 = vmatprep.subr.mxu0 0.0
        %329 = vmatpush1.msra.mxu0 0.0
        %330 = vmatprep.subr.mxu0 0.0
        %331 = vmatpush1.msra.mxu0 0.0
        %332 = vmatprep.subr.mxu0 0.0
        %333 = vmatpush1.msra.mxu0 0.0
        %334 = vmatprep.subr.mxu0 0.0
        %335 = vmatpush1.msra.mxu0 0.0
        %336 = vmatprep.subr.mxu0 0.0
        %337 = vmatpush1.msra.mxu0 0.0
        %338 = vmatprep.subr.mxu0 0.0
        %339 = vmatpush1.msra.mxu0 0.0
        %340 = vmatprep.subr.mxu0 0.0
        %341 = vmatpush1.msra.mxu0 0.0
        %342 = vmatprep.subr.mxu0 0.0
        %343 = vmatpush1.msra.mxu0 0.0
        %344 = vmatprep.subr.mxu0 0.0
        %345 = vmatpush1.msra.mxu0 0.0
        %346 = vmatprep.subr.mxu0 0.0
        %347 = vmatpush1.msra.mxu0 0.0
        %348 = vmatprep.subr.mxu0 0.0
        %349 = vmatpush1.msra.mxu0 0.0
        %350 = vmatprep.subr.mxu0 0.0
        %351 = vmatpush1.msra.mxu0 0.0
        %352 = vmatprep.subr.mxu0 0.0
        %353 = vmatpush1.msra.mxu0 0.0
        %354 = vmatprep.subr.mxu0 0.0
        %355 = vmatpush1.msra.mxu0 0.0
        %356 = vmatprep.subr.mxu0 0.0
        %357 = vmatpush1.msra.mxu0 0.0
        %358 = vmatprep.subr.mxu0 0.0
        %359 = vmatpush1.msra.mxu0 0.0
        %360 = vmatprep.subr.mxu0 0.0
        %361 = vmatpush1.msra.mxu0 0.0
        %362 = vmatprep.mubr.f32.mxu0 0.0
        %363 = vmatmul.mubr.f32.gmra.mrb[0].mxu0 %v291
        %v364 = vpop.f32.mrb[0].mxu0
        %v365 = vadd.f32 0.0, %v364
        %v366 = vpop.f32.mrb[0].mxu0
        %v367 = vadd.f32 0.0, %v366
        %368 = vdwg.mxu0
        %v370 = vsel %vm289, %v286, 0
        %v373 = vsel %vm293, %v263, 0
        %v376 = vsel %vm293, %v264, 0
        %378 = vmatprep.subr.mxu0 %v376
        %379 = vmatpush1.msra.mxu0 %v373
        %380 = vmatprep.subr.mxu0 0.0
        %381 = vmatpush1.msra.mxu0 0.0
        %382 = vmatprep.subr.mxu0 0.0
        %383 = vmatpush1.msra.mxu0 0.0
        %384 = vmatprep.subr.mxu0 0.0
        %385 = vmatpush1.msra.mxu0 0.0
        %386 = vmatprep.subr.mxu0 0.0
        %387 = vmatpush1.msra.mxu0 0.0
        %388 = vmatprep.subr.mxu0 0.0
        %389 = vmatpush1.msra.mxu0 0.0
        %390 = vmatprep.subr.mxu0 0.0
        %391 = vmatpush1.msra.mxu0 0.0
        %392 = vmatprep.subr.mxu0 0.0
        %393 = vmatpush1.msra.mxu0 0.0
        %394 = vmatprep.subr.mxu0 0.0
        %395 = vmatpush1.msra.mxu0 0.0
        %396 = vmatprep.subr.mxu0 0.0
        %397 = vmatpush1.msra.mxu0 0.0
        %398 = vmatprep.subr.mxu0 0.0
        %399 = vmatpush1.msra.mxu0 0.0
        %400 = vmatprep.subr.mxu0 0.0
        %401 = vmatpush1.msra.mxu0 0.0
        %402 = vmatprep.subr.mxu0 0.0
        %403 = vmatpush1.msra.mxu0 0.0
        %404 = vmatprep.subr.mxu0 0.0
        %405 = vmatpush1.msra.mxu0 0.0
        %406 = vmatprep.subr.mxu0 0.0
        %407 = vmatpush1.msra.mxu0 0.0
        %408 = vmatprep.subr.mxu0 0.0
        %409 = vmatpush1.msra.mxu0 0.0
        %410 = vmatprep.subr.mxu0 0.0
        %411 = vmatpush1.msra.mxu0 0.0
        %412 = vmatprep.subr.mxu0 0.0
        %413 = vmatpush1.msra.mxu0 0.0
        %414 = vmatprep.subr.mxu0 0.0
        %415 = vmatpush1.msra.mxu0 0.0
        %416 = vmatprep.subr.mxu0 0.0
        %417 = vmatpush1.msra.mxu0 0.0
        %418 = vmatprep.subr.mxu0 0.0
        %419 = vmatpush1.msra.mxu0 0.0
        %420 = vmatprep.subr.mxu0 0.0
        %421 = vmatpush1.msra.mxu0 0.0
        %422 = vmatprep.subr.mxu0 0.0
        %423 = vmatpush1.msra.mxu0 0.0
        %424 = vmatprep.subr.mxu0 0.0
        %425 = vmatpush1.msra.mxu0 0.0
        %426 = vmatprep.subr.mxu0 0.0
        %427 = vmatpush1.msra.mxu0 0.0
        %428 = vmatprep.subr.mxu0 0.0
        %429 = vmatpush1.msra.mxu0 0.0
        %430 = vmatprep.subr.mxu0 0.0
        %431 = vmatpush1.msra.mxu0 0.0
        %432 = vmatprep.subr.mxu0 0.0
        %433 = vmatpush1.msra.mxu0 0.0
        %434 = vmatprep.subr.mxu0 0.0
        %435 = vmatpush1.msra.mxu0 0.0
        %436 = vmatprep.subr.mxu0 0.0
        %437 = vmatpush1.msra.mxu0 0.0
        %438 = vmatprep.subr.mxu0 0.0
        %439 = vmatpush1.msra.mxu0 0.0
        %440 = vmatprep.subr.mxu0 0.0
        %441 = vmatpush1.msra.mxu0 0.0
        %442 = vmatprep.mubr.f32.mxu0 0.0
        %443 = vmatmul.mubr.f32.gmra.mrb[0].mxu0 %v370
        %v444 = vpop.f32.mrb[0].mxu0
        %v445 = vadd.f32 %v365, %v444
        %v446 = vpop.f32.mrb[0].mxu0
        %v447 = vadd.f32 %v367, %v446
        %448 = vdwg.mxu0
        %s449 = scalar_lea.vmem [#allocation4], 20
        %v450 = vld [vmem:[%s449] sm:$0x7]
        %v452 = vsel %vm289, %v450, 0
        %v455 = vsel %vm293, %v283, 0
        %v458 = vsel %vm293, %v284, 0
        %460 = vmatprep.subr.mxu0 %v458
        %461 = vmatpush1.msra.mxu0 %v455
        %462 = vmatprep.subr.mxu0 0.0
        %463 = vmatpush1.msra.mxu0 0.0
        %464 = vmatprep.subr.mxu0 0.0
        %465 = vmatpush1.msra.mxu0 0.0
        %466 = vmatprep.subr.mxu0 0.0
        %467 = vmatpush1.msra.mxu0 0.0
        %468 = vmatprep.subr.mxu0 0.0
        %469 = vmatpush1.msra.mxu0 0.0
        %470 = vmatprep.subr.mxu0 0.0
        %471 = vmatpush1.msra.mxu0 0.0
        %472 = vmatprep.subr.mxu0 0.0
        %473 = vmatpush1.msra.mxu0 0.0
        %474 = vmatprep.subr.mxu0 0.0
        %475 = vmatpush1.msra.mxu0 0.0
        %476 = vmatprep.subr.mxu0 0.0
        %477 = vmatpush1.msra.mxu0 0.0
        %478 = vmatprep.subr.mxu0 0.0
        %479 = vmatpush1.msra.mxu0 0.0
        %480 = vmatprep.subr.mxu0 0.0
        %481 = vmatpush1.msra.mxu0 0.0
        %482 = vmatprep.subr.mxu0 0.0
        %483 = vmatpush1.msra.mxu0 0.0
        %484 = vmatprep.subr.mxu0 0.0
        %485 = vmatpush1.msra.mxu0 0.0
        %486 = vmatprep.subr.mxu0 0.0
        %487 = vmatpush1.msra.mxu0 0.0
        %488 = vmatprep.subr.mxu0 0.0
        %489 = vmatpush1.msra.mxu0 0.0
        %490 = vmatprep.subr.mxu0 0.0
        %491 = vmatpush1.msra.mxu0 0.0
        %492 = vmatprep.subr.mxu0 0.0
        %493 = vmatpush1.msra.mxu0 0.0
        %494 = vmatprep.subr.mxu0 0.0
        %495 = vmatpush1.msra.mxu0 0.0
        %496 = vmatprep.subr.mxu0 0.0
        %497 = vmatpush1.msra.mxu0 0.0
        %498 = vmatprep.subr.mxu0 0.0
        %499 = vmatpush1.msra.mxu0 0.0
        %500 = vmatprep.subr.mxu0 0.0
        %501 = vmatpush1.msra.mxu0 0.0
        %502 = vmatprep.subr.mxu0 0.0
        %503 = vmatpush1.msra.mxu0 0.0
        %504 = vmatprep.subr.mxu0 0.0
        %505 = vmatpush1.msra.mxu0 0.0
        %506 = vmatprep.subr.mxu0 0.0
        %507 = vmatpush1.msra.mxu0 0.0
        %508 = vmatprep.subr.mxu0 0.0
        %509 = vmatpush1.msra.mxu0 0.0
        %510 = vmatprep.subr.mxu0 0.0
        %511 = vmatpush1.msra.mxu0 0.0
        %512 = vmatprep.subr.mxu0 0.0
        %513 = vmatpush1.msra.mxu0 0.0
        %514 = vmatprep.subr.mxu0 0.0
        %515 = vmatpush1.msra.mxu0 0.0
        %516 = vmatprep.subr.mxu0 0.0
        %517 = vmatpush1.msra.mxu0 0.0
        %518 = vmatprep.subr.mxu0 0.0
        %519 = vmatpush1.msra.mxu0 0.0
        %520 = vmatprep.subr.mxu0 0.0
        %521 = vmatpush1.msra.mxu0 0.0
        %522 = vmatprep.subr.mxu0 0.0
        %523 = vmatpush1.msra.mxu0 0.0
        %524 = vmatprep.mubr.f32.mxu0 0.0
        %525 = vmatmul.mubr.f32.gmra.mrb[0].mxu0 %v452
        %v526 = vpop.f32.mrb[0].mxu0
        %v527 = vadd.f32 0.0, %v526
        %v528 = vpop.f32.mrb[0].mxu0
        %v529 = vadd.f32 0.0, %v528
        %530 = vdwg.mxu0
        %v531 = vadd.f32 %v445, %v527
        %v532 = vadd.f32 %v447, %v529
        %v533 = vld [vmem:[#allocation4] sm:$0x7]
        %s534 = scalar_lea.vmem [#allocation4], 4
        %v535 = vld [vmem:[%s534] sm:$0x7]
        %v537 = vsel %vm289, %v535, 0
        %539 = vmatprep.subr.mxu0 %v296
        %540 = vmatpush1.msra.mxu0 %v294
        %541 = vmatprep.subr.mxu0 0.0
        %542 = vmatpush1.msra.mxu0 0.0
        %543 = vmatprep.subr.mxu0 0.0
        %544 = vmatpush1.msra.mxu0 0.0
        %545 = vmatprep.subr.mxu0 0.0
        %546 = vmatpush1.msra.mxu0 0.0
        %547 = vmatprep.subr.mxu0 0.0
        %548 = vmatpush1.msra.mxu0 0.0
        %549 = vmatprep.subr.mxu0 0.0
        %550 = vmatpush1.msra.mxu0 0.0
        %551 = vmatprep.subr.mxu0 0.0
        %552 = vmatpush1.msra.mxu0 0.0
        %553 = vmatprep.subr.mxu0 0.0
        %554 = vmatpush1.msra.mxu0 0.0
        %555 = vmatprep.subr.mxu0 0.0
        %556 = vmatpush1.msra.mxu0 0.0
        %557 = vmatprep.subr.mxu0 0.0
        %558 = vmatpush1.msra.mxu0 0.0
        %559 = vmatprep.subr.mxu0 0.0
        %560 = vmatpush1.msra.mxu0 0.0
        %561 = vmatprep.subr.mxu0 0.0
        %562 = vmatpush1.msra.mxu0 0.0
        %563 = vmatprep.subr.mxu0 0.0
        %564 = vmatpush1.msra.mxu0 0.0
        %565 = vmatprep.subr.mxu0 0.0
        %566 = vmatpush1.msra.mxu0 0.0
        %567 = vmatprep.subr.mxu0 0.0
        %568 = vmatpush1.msra.mxu0 0.0
        %569 = vmatprep.subr.mxu0 0.0
        %570 = vmatpush1.msra.mxu0 0.0
        %571 = vmatprep.subr.mxu0 0.0
        %572 = vmatpush1.msra.mxu0 0.0
        %573 = vmatprep.subr.mxu0 0.0
        %574 = vmatpush1.msra.mxu0 0.0
        %575 = vmatprep.subr.mxu0 0.0
        %576 = vmatpush1.msra.mxu0 0.0
        %577 = vmatprep.subr.mxu0 0.0
        %578 = vmatpush1.msra.mxu0 0.0
        %579 = vmatprep.subr.mxu0 0.0
        %580 = vmatpush1.msra.mxu0 0.0
        %581 = vmatprep.subr.mxu0 0.0
        %582 = vmatpush1.msra.mxu0 0.0
        %583 = vmatprep.subr.mxu0 0.0
        %584 = vmatpush1.msra.mxu0 0.0
        %585 = vmatprep.subr.mxu0 0.0
        %586 = vmatpush1.msra.mxu0 0.0
        %587 = vmatprep.subr.mxu0 0.0
        %588 = vmatpush1.msra.mxu0 0.0
        %589 = vmatprep.subr.mxu0 0.0
        %590 = vmatpush1.msra.mxu0 0.0
        %591 = vmatprep.subr.mxu0 0.0
        %592 = vmatpush1.msra.mxu0 0.0
        %593 = vmatprep.subr.mxu0 0.0
        %594 = vmatpush1.msra.mxu0 0.0
        %595 = vmatprep.subr.mxu0 0.0
        %596 = vmatpush1.msra.mxu0 0.0
        %597 = vmatprep.subr.mxu0 0.0
        %598 = vmatpush1.msra.mxu0 0.0
        %599 = vmatprep.subr.mxu0 0.0
        %600 = vmatpush1.msra.mxu0 0.0
        %601 = vmatprep.subr.mxu0 0.0
        %602 = vmatpush1.msra.mxu0 0.0
        %603 = vmatprep.mubr.f32.mxu0 0.0
        %604 = vmatmul.mubr.f32.gmra.mrb[0].mxu0 %v537
        %v605 = vpop.f32.mrb[0].mxu0
        %v606 = vadd.f32 0.0, %v605
        %v607 = vpop.f32.mrb[0].mxu0
        %v608 = vadd.f32 0.0, %v607
        %609 = vdwg.mxu0
        %v611 = vsel %vm289, %v533, 0
        %613 = vmatprep.subr.mxu0 %v376
        %614 = vmatpush1.msra.mxu0 %v373
        %615 = vmatprep.subr.mxu0 0.0
        %616 = vmatpush1.msra.mxu0 0.0
        %617 = vmatprep.subr.mxu0 0.0
        %618 = vmatpush1.msra.mxu0 0.0
        %619 = vmatprep.subr.mxu0 0.0
        %620 = vmatpush1.msra.mxu0 0.0
        %621 = vmatprep.subr.mxu0 0.0
        %622 = vmatpush1.msra.mxu0 0.0
        %623 = vmatprep.subr.mxu0 0.0
        %624 = vmatpush1.msra.mxu0 0.0
        %625 = vmatprep.subr.mxu0 0.0
        %626 = vmatpush1.msra.mxu0 0.0
        %627 = vmatprep.subr.mxu0 0.0
        %628 = vmatpush1.msra.mxu0 0.0
        %629 = vmatprep.subr.mxu0 0.0
        %630 = vmatpush1.msra.mxu0 0.0
        %631 = vmatprep.subr.mxu0 0.0
        %632 = vmatpush1.msra.mxu0 0.0
        %633 = vmatprep.subr.mxu0 0.0
        %634 = vmatpush1.msra.mxu0 0.0
        %635 = vmatprep.subr.mxu0 0.0
        %636 = vmatpush1.msra.mxu0 0.0
        %637 = vmatprep.subr.mxu0 0.0
        %638 = vmatpush1.msra.mxu0 0.0
        %639 = vmatprep.subr.mxu0 0.0
        %640 = vmatpush1.msra.mxu0 0.0
        %641 = vmatprep.subr.mxu0 0.0
        %642 = vmatpush1.msra.mxu0 0.0
        %643 = vmatprep.subr.mxu0 0.0
        %644 = vmatpush1.msra.mxu0 0.0
        %645 = vmatprep.subr.mxu0 0.0
        %646 = vmatpush1.msra.mxu0 0.0
        %647 = vmatprep.subr.mxu0 0.0
        %648 = vmatpush1.msra.mxu0 0.0
        %649 = vmatprep.subr.mxu0 0.0
        %650 = vmatpush1.msra.mxu0 0.0
        %651 = vmatprep.subr.mxu0 0.0
        %652 = vmatpush1.msra.mxu0 0.0
        %653 = vmatprep.subr.mxu0 0.0
        %654 = vmatpush1.msra.mxu0 0.0
        %655 = vmatprep.subr.mxu0 0.0
        %656 = vmatpush1.msra.mxu0 0.0
        %657 = vmatprep.subr.mxu0 0.0
        %658 = vmatpush1.msra.mxu0 0.0
        %659 = vmatprep.subr.mxu0 0.0
        %660 = vmatpush1.msra.mxu0 0.0
        %661 = vmatprep.subr.mxu0 0.0
        %662 = vmatpush1.msra.mxu0 0.0
        %663 = vmatprep.subr.mxu0 0.0
        %664 = vmatpush1.msra.mxu0 0.0
        %665 = vmatprep.subr.mxu0 0.0
        %666 = vmatpush1.msra.mxu0 0.0
        %667 = vmatprep.subr.mxu0 0.0
        %668 = vmatpush1.msra.mxu0 0.0
        %669 = vmatprep.subr.mxu0 0.0
        %670 = vmatpush1.msra.mxu0 0.0
        %671 = vmatprep.subr.mxu0 0.0
        %672 = vmatpush1.msra.mxu0 0.0
        %673 = vmatprep.subr.mxu0 0.0
        %674 = vmatpush1.msra.mxu0 0.0
        %675 = vmatprep.subr.mxu0 0.0
        %676 = vmatpush1.msra.mxu0 0.0
        %677 = vmatprep.mubr.f32.mxu0 0.0
        %678 = vmatmul.mubr.f32.gmra.mrb[0].mxu0 %v611
        %v679 = vpop.f32.mrb[0].mxu0
        %v680 = vadd.f32 %v606, %v679
        %v681 = vpop.f32.mrb[0].mxu0
        %v682 = vadd.f32 %v608, %v681
        %683 = vdwg.mxu0
        %s684 = scalar_lea.vmem [#allocation4], 8
        %v685 = vld [vmem:[%s684] sm:$0x7]
        %v687 = vsel %vm289, %v685, 0
        %689 = vmatprep.subr.mxu0 %v458
        %690 = vmatpush1.msra.mxu0 %v455
        %691 = vmatprep.subr.mxu0 0.0
        %692 = vmatpush1.msra.mxu0 0.0
        %693 = vmatprep.subr.mxu0 0.0
        %694 = vmatpush1.msra.mxu0 0.0
        %695 = vmatprep.subr.mxu0 0.0
        %696 = vmatpush1.msra.mxu0 0.0
        %697 = vmatprep.subr.mxu0 0.0
        %698 = vmatpush1.msra.mxu0 0.0
        %699 = vmatprep.subr.mxu0 0.0
        %700 = vmatpush1.msra.mxu0 0.0
        %701 = vmatprep.subr.mxu0 0.0
        %702 = vmatpush1.msra.mxu0 0.0
        %703 = vmatprep.subr.mxu0 0.0
        %704 = vmatpush1.msra.mxu0 0.0
        %705 = vmatprep.subr.mxu0 0.0
        %706 = vmatpush1.msra.mxu0 0.0
        %707 = vmatprep.subr.mxu0 0.0
        %708 = vmatpush1.msra.mxu0 0.0
        %709 = vmatprep.subr.mxu0 0.0
        %710 = vmatpush1.msra.mxu0 0.0
        %711 = vmatprep.subr.mxu0 0.0
        %712 = vmatpush1.msra.mxu0 0.0
        %713 = vmatprep.subr.mxu0 0.0
        %714 = vmatpush1.msra.mxu0 0.0
        %715 = vmatprep.subr.mxu0 0.0
        %716 = vmatpush1.msra.mxu0 0.0
        %717 = vmatprep.subr.mxu0 0.0
        %718 = vmatpush1.msra.mxu0 0.0
        %719 = vmatprep.subr.mxu0 0.0
        %720 = vmatpush1.msra.mxu0 0.0
        %721 = vmatprep.subr.mxu0 0.0
        %722 = vmatpush1.msra.mxu0 0.0
        %723 = vmatprep.subr.mxu0 0.0
        %724 = vmatpush1.msra.mxu0 0.0
        %725 = vmatprep.subr.mxu0 0.0
        %726 = vmatpush1.msra.mxu0 0.0
        %727 = vmatprep.subr.mxu0 0.0
        %728 = vmatpush1.msra.mxu0 0.0
        %729 = vmatprep.subr.mxu0 0.0
        %730 = vmatpush1.msra.mxu0 0.0
        %731 = vmatprep.subr.mxu0 0.0
        %732 = vmatpush1.msra.mxu0 0.0
        %733 = vmatprep.subr.mxu0 0.0
        %734 = vmatpush1.msra.mxu0 0.0
        %735 = vmatprep.subr.mxu0 0.0
        %736 = vmatpush1.msra.mxu0 0.0
        %737 = vmatprep.subr.mxu0 0.0
        %738 = vmatpush1.msra.mxu0 0.0
        %739 = vmatprep.subr.mxu0 0.0
        %740 = vmatpush1.msra.mxu0 0.0
        %741 = vmatprep.subr.mxu0 0.0
        %742 = vmatpush1.msra.mxu0 0.0
        %743 = vmatprep.subr.mxu0 0.0
        %744 = vmatpush1.msra.mxu0 0.0
        %745 = vmatprep.subr.mxu0 0.0
        %746 = vmatpush1.msra.mxu0 0.0
        %747 = vmatprep.subr.mxu0 0.0
        %748 = vmatpush1.msra.mxu0 0.0
        %749 = vmatprep.subr.mxu0 0.0
        %750 = vmatpush1.msra.mxu0 0.0
        %751 = vmatprep.subr.mxu0 0.0
        %752 = vmatpush1.msra.mxu0 0.0
        %753 = vmatprep.mubr.f32.mxu0 0.0
        %754 = vmatmul.mubr.f32.gmra.mrb[0].mxu0 %v687
        %v755 = vpop.f32.mrb[0].mxu0
        %v756 = vadd.f32 0.0, %v755
        %v757 = vpop.f32.mrb[0].mxu0
        %v758 = vadd.f32 0.0, %v757
        %759 = vdwg.mxu0
        %v760 = vadd.f32 %v680, %v756
        %v761 = vadd.f32 %v682, %v758
        %762 = vrot.lane.b32.xlu0 %v760, 16
        %v763 = vpop.permute.xlu0 %762
        %764 = vrot.lane.b32.xlu0 %v761, 16
        %v765 = vpop.permute.xlu0 %764
        %vm766 = vcmp.lt.s32.totalorder %v248, 16
        %v767 = vsel %vm766, %v763, %v765
        %v768 = vsel %vm766, %v765, %v763
        %v770 = vlaneseq
        %v771 = vshrl.u32 %v770, 7
        %v772 = vsub.s32 0, %v771
        %v773 = vrot.slane %v235, %v772
        %v774 = vlaneseq
        %v775 = vshrl.u32 %v774, 7
        %v776 = vsub.s32 1, %v775
        %v777 = vrot.slane %v235, %v776
        %v780 = vmul.f32 %v768, %v773
        %v781 = vmul.f32 %v767, %v777
        %v782 = vadd.f32 %v531, %v780
        %v783 = vadd.f32 %v532, %v781
        %s784 = scalar_lea.vmem [#allocation4], 24
        %v785 = vld [vmem:[%s784] sm:$0x7]
        %s786 = scalar_lea.vmem [#allocation4], 28
        %v787 = vld [vmem:[%s786] sm:$0x7]
        %v789 = vsel %vm289, %v787, 0
        %791 = vmatprep.subr.mxu0 %v296
        %792 = vmatpush1.msra.mxu0 %v294
        %793 = vmatprep.subr.mxu0 0.0
        %794 = vmatpush1.msra.mxu0 0.0
        %795 = vmatprep.subr.mxu0 0.0
        %796 = vmatpush1.msra.mxu0 0.0
        %797 = vmatprep.subr.mxu0 0.0
        %798 = vmatpush1.msra.mxu0 0.0
        %799 = vmatprep.subr.mxu0 0.0
        %800 = vmatpush1.msra.mxu0 0.0
        %801 = vmatprep.subr.mxu0 0.0
        %802 = vmatpush1.msra.mxu0 0.0
        %803 = vmatprep.subr.mxu0 0.0
        %804 = vmatpush1.msra.mxu0 0.0
        %805 = vmatprep.subr.mxu0 0.0
        %806 = vmatpush1.msra.mxu0 0.0
        %807 = vmatprep.subr.mxu0 0.0
        %808 = vmatpush1.msra.mxu0 0.0
        %809 = vmatprep.subr.mxu0 0.0
        %810 = vmatpush1.msra.mxu0 0.0
        %811 = vmatprep.subr.mxu0 0.0
        %812 = vmatpush1.msra.mxu0 0.0
        %813 = vmatprep.subr.mxu0 0.0
        %814 = vmatpush1.msra.mxu0 0.0
        %815 = vmatprep.subr.mxu0 0.0
        %816 = vmatpush1.msra.mxu0 0.0
        %817 = vmatprep.subr.mxu0 0.0
        %818 = vmatpush1.msra.mxu0 0.0
        %819 = vmatprep.subr.mxu0 0.0
        %820 = vmatpush1.msra.mxu0 0.0
        %821 = vmatprep.subr.mxu0 0.0
        %822 = vmatpush1.msra.mxu0 0.0
        %823 = vmatprep.subr.mxu0 0.0
        %824 = vmatpush1.msra.mxu0 0.0
        %825 = vmatprep.subr.mxu0 0.0
        %826 = vmatpush1.msra.mxu0 0.0
        %827 = vmatprep.subr.mxu0 0.0
        %828 = vmatpush1.msra.mxu0 0.0
        %829 = vmatprep.subr.mxu0 0.0
        %830 = vmatpush1.msra.mxu0 0.0
        %831 = vmatprep.subr.mxu0 0.0
        %832 = vmatpush1.msra.mxu0 0.0
        %833 = vmatprep.subr.mxu0 0.0
        %834 = vmatpush1.msra.mxu0 0.0
        %835 = vmatprep.subr.mxu0 0.0
        %836 = vmatpush1.msra.mxu0 0.0
        %837 = vmatprep.subr.mxu0 0.0
        %838 = vmatpush1.msra.mxu0 0.0
        %839 = vmatprep.subr.mxu0 0.0
        %840 = vmatpush1.msra.mxu0 0.0
        %841 = vmatprep.subr.mxu0 0.0
        %842 = vmatpush1.msra.mxu0 0.0
        %843 = vmatprep.subr.mxu0 0.0
        %844 = vmatpush1.msra.mxu0 0.0
        %845 = vmatprep.subr.mxu0 0.0
        %846 = vmatpush1.msra.mxu0 0.0
        %847 = vmatprep.subr.mxu0 0.0
        %848 = vmatpush1.msra.mxu0 0.0
        %849 = vmatprep.subr.mxu0 0.0
        %850 = vmatpush1.msra.mxu0 0.0
        %851 = vmatprep.subr.mxu0 0.0
        %852 = vmatpush1.msra.mxu0 0.0
        %853 = vmatprep.subr.mxu0 0.0
        %854 = vmatpush1.msra.mxu0 0.0
        %855 = vmatprep.mubr.f32.mxu0 0.0
        %856 = vmatmul.mubr.f32.gmra.mrb[0].mxu0 %v789
        %v857 = vpop.f32.mrb[0].mxu0
        %v858 = vadd.f32 0.0, %v857
        %v859 = vpop.f32.mrb[0].mxu0
        %v860 = vadd.f32 0.0, %v859
        %861 = vdwg.mxu0
        %v863 = vsel %vm289, %v785, 0
        %865 = vmatprep.subr.mxu0 %v376
        %866 = vmatpush1.msra.mxu0 %v373
        %867 = vmatprep.subr.mxu0 0.0
        %868 = vmatpush1.msra.mxu0 0.0
        %869 = vmatprep.subr.mxu0 0.0
        %870 = vmatpush1.msra.mxu0 0.0
        %871 = vmatprep.subr.mxu0 0.0
        %872 = vmatpush1.msra.mxu0 0.0
        %873 = vmatprep.subr.mxu0 0.0
        %874 = vmatpush1.msra.mxu0 0.0
        %875 = vmatprep.subr.mxu0 0.0
        %876 = vmatpush1.msra.mxu0 0.0
        %877 = vmatprep.subr.mxu0 0.0
        %878 = vmatpush1.msra.mxu0 0.0
        %879 = vmatprep.subr.mxu0 0.0
        %880 = vmatpush1.msra.mxu0 0.0
        %881 = vmatprep.subr.mxu0 0.0
        %882 = vmatpush1.msra.mxu0 0.0
        %883 = vmatprep.subr.mxu0 0.0
        %884 = vmatpush1.msra.mxu0 0.0
        %885 = vmatprep.subr.mxu0 0.0
        %886 = vmatpush1.msra.mxu0 0.0
        %887 = vmatprep.subr.mxu0 0.0
        %888 = vmatpush1.msra.mxu0 0.0
        %889 = vmatprep.subr.mxu0 0.0
        %890 = vmatpush1.msra.mxu0 0.0
        %891 = vmatprep.subr.mxu0 0.0
        %892 = vmatpush1.msra.mxu0 0.0
        %893 = vmatprep.subr.mxu0 0.0
        %894 = vmatpush1.msra.mxu0 0.0
        %895 = vmatprep.subr.mxu0 0.0
        %896 = vmatpush1.msra.mxu0 0.0
        %897 = vmatprep.subr.mxu0 0.0
        %898 = vmatpush1.msra.mxu0 0.0
        %899 = vmatprep.subr.mxu0 0.0
        %900 = vmatpush1.msra.mxu0 0.0
        %901 = vmatprep.subr.mxu0 0.0
        %902 = vmatpush1.msra.mxu0 0.0
        %903 = vmatprep.subr.mxu0 0.0
        %904 = vmatpush1.msra.mxu0 0.0
        %905 = vmatprep.subr.mxu0 0.0
        %906 = vmatpush1.msra.mxu0 0.0
        %907 = vmatprep.subr.mxu0 0.0
        %908 = vmatpush1.msra.mxu0 0.0
        %909 = vmatprep.subr.mxu0 0.0
        %910 = vmatpush1.msra.mxu0 0.0
        %911 = vmatprep.subr.mxu0 0.0
        %912 = vmatpush1.msra.mxu0 0.0
        %913 = vmatprep.subr.mxu0 0.0
        %914 = vmatpush1.msra.mxu0 0.0
        %915 = vmatprep.subr.mxu0 0.0
        %916 = vmatpush1.msra.mxu0 0.0
        %917 = vmatprep.subr.mxu0 0.0
        %918 = vmatpush1.msra.mxu0 0.0
        %919 = vmatprep.subr.mxu0 0.0
        %920 = vmatpush1.msra.mxu0 0.0
        %921 = vmatprep.subr.mxu0 0.0
        %922 = vmatpush1.msra.mxu0 0.0
        %923 = vmatprep.subr.mxu0 0.0
        %924 = vmatpush1.msra.mxu0 0.0
        %925 = vmatprep.subr.mxu0 0.0
        %926 = vmatpush1.msra.mxu0 0.0
        %927 = vmatprep.subr.mxu0 0.0
        %928 = vmatpush1.msra.mxu0 0.0
        %929 = vmatprep.mubr.f32.mxu0 0.0
        %930 = vmatmul.mubr.f32.gmra.mrb[0].mxu0 %v863
        %v931 = vpop.f32.mrb[0].mxu0
        %v932 = vadd.f32 %v858, %v931
        %v933 = vpop.f32.mrb[0].mxu0
        %v934 = vadd.f32 %v860, %v933
        %935 = vdwg.mxu0
        %s936 = scalar_lea.vmem [#allocation4], 32
        %v937 = vld [vmem:[%s936] sm:$0x7]
        %v939 = vsel %vm289, %v937, 0
        %941 = vmatprep.subr.mxu0 %v458
        %942 = vmatpush1.msra.mxu0 %v455
        %943 = vmatprep.subr.mxu0 0.0
        %944 = vmatpush1.msra.mxu0 0.0
        %945 = vmatprep.subr.mxu0 0.0
        %946 = vmatpush1.msra.mxu0 0.0
        %947 = vmatprep.subr.mxu0 0.0
        %948 = vmatpush1.msra.mxu0 0.0
        %949 = vmatprep.subr.mxu0 0.0
        %950 = vmatpush1.msra.mxu0 0.0
        %951 = vmatprep.subr.mxu0 0.0
        %952 = vmatpush1.msra.mxu0 0.0
        %953 = vmatprep.subr.mxu0 0.0
        %954 = vmatpush1.msra.mxu0 0.0
        %955 = vmatprep.subr.mxu0 0.0
        %956 = vmatpush1.msra.mxu0 0.0
        %957 = vmatprep.subr.mxu0 0.0
        %958 = vmatpush1.msra.mxu0 0.0
        %959 = vmatprep.subr.mxu0 0.0
        %960 = vmatpush1.msra.mxu0 0.0
        %961 = vmatprep.subr.mxu0 0.0
        %962 = vmatpush1.msra.mxu0 0.0
        %963 = vmatprep.subr.mxu0 0.0
        %964 = vmatpush1.msra.mxu0 0.0
        %965 = vmatprep.subr.mxu0 0.0
        %966 = vmatpush1.msra.mxu0 0.0
        %967 = vmatprep.subr.mxu0 0.0
        %968 = vmatpush1.msra.mxu0 0.0
        %969 = vmatprep.subr.mxu0 0.0
        %970 = vmatpush1.msra.mxu0 0.0
        %971 = vmatprep.subr.mxu0 0.0
        %972 = vmatpush1.msra.mxu0 0.0
        %973 = vmatprep.subr.mxu0 0.0
        %974 = vmatpush1.msra.mxu0 0.0
        %975 = vmatprep.subr.mxu0 0.0
        %976 = vmatpush1.msra.mxu0 0.0
        %977 = vmatprep.subr.mxu0 0.0
        %978 = vmatpush1.msra.mxu0 0.0
        %979 = vmatprep.subr.mxu0 0.0
        %980 = vmatpush1.msra.mxu0 0.0
        %981 = vmatprep.subr.mxu0 0.0
        %982 = vmatpush1.msra.mxu0 0.0
        %983 = vmatprep.subr.mxu0 0.0
        %984 = vmatpush1.msra.mxu0 0.0
        %985 = vmatprep.subr.mxu0 0.0
        %986 = vmatpush1.msra.mxu0 0.0
        %987 = vmatprep.subr.mxu0 0.0
        %988 = vmatpush1.msra.mxu0 0.0
        %989 = vmatprep.subr.mxu0 0.0
        %990 = vmatpush1.msra.mxu0 0.0
        %991 = vmatprep.subr.mxu0 0.0
        %992 = vmatpush1.msra.mxu0 0.0
        %993 = vmatprep.subr.mxu0 0.0
        %994 = vmatpush1.msra.mxu0 0.0
        %995 = vmatprep.subr.mxu0 0.0
        %996 = vmatpush1.msra.mxu0 0.0
        %997 = vmatprep.subr.mxu0 0.0
        %998 = vmatpush1.msra.mxu0 0.0
        %999 = vmatprep.subr.mxu0 0.0
        %1000 = vmatpush1.msra.mxu0 0.0
        %1001 = vmatprep.subr.mxu0 0.0
        %1002 = vmatpush1.msra.mxu0 0.0
        %1003 = vmatprep.subr.mxu0 0.0
        %1004 = vmatpush1.msra.mxu0 0.0
        %1005 = vmatprep.mubr.f32.mxu0 0.0
        %1006 = vmatmul.mubr.f32.gmra.mrb[0].mxu0 %v939
        %v1007 = vpop.f32.mrb[0].mxu0
        %v1008 = vadd.f32 0.0, %v1007
        %v1009 = vpop.f32.mrb[0].mxu0
        %v1010 = vadd.f32 0.0, %v1009
        %1011 = vdwg.mxu0
        %v1012 = vadd.f32 %v932, %v1008
        %v1013 = vadd.f32 %v934, %v1010
        %1014 = vrot.lane.b32.xlu0 %v1012, 112
        %v1015 = vpop.permute.xlu0 %1014
        %1016 = vrot.lane.b32.xlu0 %v1013, 112
        %v1017 = vpop.permute.xlu0 %1016
        %vm1018 = vcmp.lt.s32.totalorder %v248, 112
        %v1019 = vsel %vm1018, %v1015, %v1017
        %v1020 = vsel %vm1018, %v1017, %v1015
        %v1022 = vlaneseq
        %v1023 = vshrl.u32 %v1022, 7
        %v1024 = vsub.s32 0, %v1023
        %v1025 = vrot.slane %v237, %v1024
        %v1026 = vlaneseq
        %v1027 = vshrl.u32 %v1026, 7
        %v1028 = vsub.s32 1, %v1027
        %v1029 = vrot.slane %v237, %v1028
        %v1032 = vmul.f32 %v1019, %v1025
        %v1033 = vmul.f32 %v1020, %v1029
        %v1034 = vadd.f32 %v782, %v1032
        %v1035 = vadd.f32 %v783, %v1033
        %1037 = vset.pattern.permute.xlu0 0
        %1038 = vperm.xlu0 %1037, %v238
        %v1039 = vpop.permute.xlu0 %1038
        %v1041 = vadd.f32 %v1034, %v1039
        %v1042 = vadd.f32 %v1035, %v1039
        %v1045 = vcombine.low %v1041, %v1042
        %1047 = vst [vmem:[%s230] sm:$0x77] %v1045
        %p1048 = scmp.lt.s32.totalorder %s19, 1
        %s1049 = scalar_select %p1048, %s19, 1
        %s1050 = smul.addr %s1049, 2
        %s1051 = smul.addr %s1050, 4
        %s1052 = scalar_lea.vmem %s4, %s1051
        // Predicated region
        $region45: #{tpu_custom_call.1} parent=35 // pred_check
          %p1053 = pneg %p126
        $region46: #{tpu_custom_call.1} parent=35 // pred_check_branch
          %1055 = sbr.rel (%p1053) target = $region48
        $region47: #{tpu_custom_call.1} parent=35 // pred_region
          _
        $region48: #{tpu_custom_call.1} parent=35 // pred_fallthru
          _
      $region36: #{tpu_custom_call.1} parent=5 // pred_fallthru
        _
      %p1056 = scmp.le.s32.totalorder 2, %s14
      // Predicated region
      $region49: #{tpu_custom_call.1} parent=5 // pred_check
        %p1057 = pneg %p1056
      $region50: #{tpu_custom_call.1} parent=5 // pred_check_branch
        %1059 = sbr.rel (%p1057) target = $region52
      $region51: #{tpu_custom_call.1} parent=5 // pred_region
        %s1060 = ssub.s32 %s14, 2
        // Predicated region
        $region53: #{tpu_custom_call.1} parent=51 // pred_check
          %p1061 = pneg %p132
        $region54: #{tpu_custom_call.1} parent=51 // pred_check_branch
          %1063 = sbr.rel (%p1061) target = $region56
        $region55: #{tpu_custom_call.1} parent=51 // pred_region
          %p1064 = scmp.lt.s32.totalorder %s20, 1
          %s1065 = scalar_select %p1064, %s20, 1
          %s1066 = smul.addr %s1065, 2
          %s1067 = smul.addr %s1066, 4
          %s1068 = scalar_lea.vmem %s4, %s1067
        $region56: #{tpu_custom_call.1} parent=51 // pred_fallthru
          _
      $region52: #{tpu_custom_call.1} parent=5 // pred_fallthru
        _
    $region6: #{tpu_custom_call.1} parent=1 // loop_footer
      %s18 = sadd.s32 1, %s14
    $region7: #{tpu_custom_call.1} parent=1 // loop_footer_branch
      %13 = sbr.rel target = $region3
    $region8: #{tpu_custom_call.1} parent=1 // loop_exit
      _
    %1069 = vsyncpa [#allocation3], 1
    %s1070 = scalar_lea.sflag [#allocation3], 1
    %1071 = vsyncpa %s1070, 1
    %1072 = vsyncpa [#allocation5], 1

</llo_original>
